<compile_context>
chip_gen: v7x
topology: tpu7x:2x2x1
jax: 0.10.0
libtpu: 0.0.40
codegen_flags: <defaults>
</compile_context>

<pallas_src>
import jax
import jax.numpy as jnp
from jax.experimental import pallas as pl
from jax.experimental.pallas import tpu as pltpu

NEG_SLOPE = 0.01   # nn.LeakyReLU default
BN_EPS = 1e-5      # nn.BatchNorm1d default
LANE = 128         # lane width
SUBLANE = 16       # sublane granularity (16 keeps bf16 packing happy)


def _round_up(x, m):
    return ((x + m - 1) // m) * m


def _vmem_capacity_bytes():
    """Physical VMEM of the attached chip (falls back to v7x's 64 MiB)."""
    try:
        return int(pltpu.get_tpu_info().vmem_capacity_bytes)
    except Exception:
        return 64 << 20


# ----------------------------------------------------------------------------
# Kernel: one (TB, D_in_p) batch tile through the whole MLP.
# ----------------------------------------------------------------------------
def _disc_kernel(x_ref, w1_ref, b1_ref, w2_ref, b2_ref, w3_ref, b3_ref, o_ref):
    cdt = w1_ref.dtype  # compute dtype for matmul operands / hidden epilogues
    x = x_ref[...]

    # --- Linear 1 (BN folded in), f32 MXU accumulation, epilogue in cdt ---
    h = jnp.dot(x, w1_ref[...], preferred_element_type=jnp.float32).astype(cdt)
    h = h + b1_ref[...]
    h = jnp.where(h >= 0, h, NEG_SLOPE * h)          # LeakyReLU

    # --- Linear 2 (BN folded in) + LeakyReLU ---
    h = jnp.dot(h, w2_ref[...], preferred_element_type=jnp.float32).astype(cdt)
    h = h + b2_ref[...]
    h = jnp.where(h >= 0, h, NEG_SLOPE * h)

    # --- Linear 3 + sigmoid (f32; tanh form keeps it on the EUP slot) ---
    z = jnp.dot(h, w3_ref[...], preferred_element_type=jnp.float32) + b3_ref[...]
    o_ref[...] = (0.5 * (jnp.tanh(0.5 * z) + 1.0)).astype(o_ref.dtype)


# ----------------------------------------------------------------------------
# One-time parameter preparation (hoisted out of the per-call hot path).
# ----------------------------------------------------------------------------
def prepare_params(params, *, compute_dtype=jnp.bfloat16, lane_multiple=LANE):
    """Fold BatchNorm1d (eval) into the Linears, pad to lane multiples, cast.

    Call once per parameter update; the returned dict is reused by
    `discriminator_apply` for every forward call.
    """
    (w1, b1, g1, be1, rm1, rv1,
     w2, b2, g2, be2, rm2, rv2,
     w3, b3) = params

    D_in, H = w1.shape
    D_out = w3.shape[1]

    # Fold BN (eval) into the preceding Linear, all in f32 (precision), cast
    # to compute_dtype only at the end:  (xW + b)*s + t == x(W*s) + (b*s + t)
    inv1 = g1 / jnp.sqrt(rv1 + BN_EPS)
    w1f = w1 * inv1[None, :]
    b1f = b1 * inv1 + (be1 - rm1 * inv1)
    inv2 = g2 / jnp.sqrt(rv2 + BN_EPS)
    w2f = w2 * inv2[None, :]
    b2f = b2 * inv2 + (be2 - rm2 * inv2)

    # Zero padding is exact: padded hidden columns stay 0 through bias-add and
    # LeakyReLU, and contribute nothing to the next matmul.
    D_in_p = _round_up(D_in, lane_multiple)
    H_p = _round_up(H, lane_multiple)
    D_out_p = _round_up(D_out, lane_multiple)

    def pad2(a, r, c, dt):
        return jnp.pad(a, ((0, r - a.shape[0]), (0, c - a.shape[1]))).astype(dt)

    def pad_row(a, c, dt):
        return jnp.pad(a, (0, c - a.shape[0])).reshape(1, c).astype(dt)

    return dict(
        w1=pad2(w1f, D_in_p, H_p, compute_dtype),
        b1=pad_row(b1f, H_p, compute_dtype),
        w2=pad2(w2f, H_p, H_p, compute_dtype),
        b2=pad_row(b2f, H_p, compute_dtype),
        w3=pad2(w3, H_p, D_out_p, compute_dtype),
        b3=pad_row(b3, D_out_p, jnp.float32),   # final bias-add stays f32
        dims=(D_in, H, D_out),
        padded=(D_in_p, H_p, D_out_p),
        compute_dtype=compute_dtype,
    )


def _choose_batch_tiling(B, tb_max):
    """Pick (B_padded, TB, n_tiles) minimising padding while giving the grid
    >=2 (ideally 4) steps for DMA/compute overlap + v7x dual-core sharding."""
    B_p = _round_up(B, SUBLANE)
    n = max(1, pl.cdiv(B_p, tb_max))
    if B_p >= 4 * 256:        # big enough: 4+ tiles, each >=256 rows
        n = max(n, 4)
    elif B_p >= 2 * 256:      # medium: at least 2 tiles for overlap
        n = max(n, 2)
    TB = _round_up(pl.cdiv(B_p, n), SUBLANE)
    B_p = _round_up(B_p, TB)
    return B_p, TB, B_p // TB


# ----------------------------------------------------------------------------
# Per-call forward (only pads/casts x, then launches the kernel).
# ----------------------------------------------------------------------------
def discriminator_apply(x, prep, *, tb_max=1024, out_dtype=jnp.float32):
    B, D_in = x.shape
    D_in0, H0, D_out = prep["dims"]
    D_in_p, H_p, D_out_p = prep["padded"]
    assert D_in == D_in0, "input feature dim mismatch"
    cdt = prep["compute_dtype"]
    dsize = jnp.dtype(cdt).itemsize
    osize = jnp.dtype(out_dtype).itemsize

    B_p, TB, n_tiles = _choose_batch_tiling(B, tb_max)
    x_p = jnp.pad(x, ((0, B_p - B), (0, D_in_p - D_in))).astype(cdt)

    # VMEM budget: double-buffered x/out tiles + single-buffered resident
    # weights + headroom for f32 intermediates; clamp to 75% of this chip's
    # physical VMEM (v5e/v6e: 128 MiB, v7x: 64 MiB).  Note: for the fully
    # fused layout H_p must stay <= ~4096 on v7x (w2 alone is 2*H_p^2 bytes);
    # beyond that, shrink TB or tile the hidden dim.
    act_bytes = 2 * TB * (D_in_p * dsize + D_out_p * osize)
    w_bytes = ((D_in_p * H_p + H_p * H_p + H_p * D_out_p + 2 * H_p) * dsize
               + D_out_p * 4)
    scratch_bytes = 4 * TB * H_p * 4
    need = act_bytes + w_bytes + scratch_bytes
    vmem_limit = int(min(max(need, 32 << 20), (_vmem_capacity_bytes() * 3) // 4))

    cost = pl.CostEstimate(
        flops=2 * B_p * (D_in_p * H_p + H_p * H_p + H_p * D_out_p),
        transcendentals=B_p * D_out_p,  # sigmoid (tanh)
        bytes_accessed=(B_p * D_in_p * dsize + w_bytes + B_p * D_out_p * osize),
    )

    def run(single_buffer_weights):
        if single_buffer_weights:
            def w_spec(shape):
                # Constant index_map -> DMA'd once; one buffer is enough.
                return pl.BlockSpec(shape, lambda i: (0, 0),
                                    pipeline_mode=pl.Buffered(1))
        else:
            def w_spec(shape):
                return pl.BlockSpec(shape, lambda i: (0, 0))

        out_p = pl.pallas_call(
            _disc_kernel,
            out_shape=jax.ShapeDtypeStruct((B_p, D_out_p), out_dtype),
            grid=(n_tiles,),
            in_specs=[
                pl.BlockSpec((TB, D_in_p), lambda i: (i, 0)),  # x tile
                w_spec((D_in_p, H_p)),                          # w1 (BN folded)
                w_spec((1, H_p)),                               # b1 (BN folded)
                w_spec((H_p, H_p)),                             # w2 (BN folded)
                w_spec((1, H_p)),                               # b2 (BN folded)
                w_spec((H_p, D_out_p)),                         # w3
                w_spec((1, D_out_p)),                           # b3
            ],
            out_specs=pl.BlockSpec((TB, D_out_p), lambda i: (i, 0)),
            compiler_params=pltpu.CompilerParams(
                dimension_semantics=("parallel",),
                vmem_limit_bytes=vmem_limit,
            ),
            cost_estimate=cost,
        )(x_p, prep["w1"], prep["b1"], prep["w2"], prep["b2"],
          prep["w3"], prep["b3"])
        return jax.block_until_ready(out_p)

    try:
        out_p = run(single_buffer_weights=True)
    except Exception:
        # Fallback if this JAX build rejects pipeline_mode=pl.Buffered(1).
        out_p = run(single_buffer_weights=False)

    return out_p[:B, :D_out]


def discriminator_forward(x, params, *, compute_dtype=jnp.bfloat16, **kwargs):
    """Convenience one-shot wrapper (prepare + apply)."""
    return discriminator_apply(x, prepare_params(params, compute_dtype=compute_dtype),
                               **kwargs)


# ----------------------------------------------------------------------------
# Parameter init + pure-JAX reference (for correctness checking).
# ----------------------------------------------------------------------------
def init_params(key, input_dims, hidden_dims, output_dims):
    """Deterministic synthetic parameter init (PyTorch-like fan-in scaling)."""
    ks = jax.random.split(key, 6)

    def lin(kw, kb, fan_in, fan_out):
        bound = 1.0 / jnp.sqrt(fan_in)
        w = jax.random.uniform(kw, (fan_in, fan_out), jnp.float32, -bound, bound)
        b = jax.random.uniform(kb, (fan_out,), jnp.float32, -bound, bound)
        return w, b

    w1, b1 = lin(ks[0], ks[1], input_dims, hidden_dims)
    w2, b2 = lin(ks[2], ks[3], hidden_dims, hidden_dims)
    w3, b3 = lin(ks[4], ks[5], hidden_dims, output_dims)

    # BatchNorm1d defaults: weight=1, bias=0, running_mean=0, running_var=1.
    g1 = jnp.ones((hidden_dims,), jnp.float32)
    be1 = jnp.zeros((hidden_dims,), jnp.float32)
    rm1 = jnp.zeros((hidden_dims,), jnp.float32)
    rv1 = jnp.ones((hidden_dims,), jnp.float32)
    g2 = jnp.ones((hidden_dims,), jnp.float32)
    be2 = jnp.zeros((hidden_dims,), jnp.float32)
    rm2 = jnp.zeros((hidden_dims,), jnp.float32)
    rv2 = jnp.ones((hidden_dims,), jnp.float32)

    return (w1, b1, g1, be1, rm1, rv1,
            w2, b2, g2, be2, rm2, rv2,
            w3, b3)


def reference_forward(x, params):
    """Pure-JAX f32 reference of the same eval-mode forward."""
    (w1, b1, g1, be1, rm1, rv1,
     w2, b2, g2, be2, rm2, rv2,
     w3, b3) = params

    def bn(h, g, be, rm, rv):
        return (h - rm) / jnp.sqrt(rv + BN_EPS) * g + be

    def lrelu(h):
        return jnp.where(h >= 0, h, NEG_SLOPE * h)

    h = x @ w1 + b1
    h = lrelu(bn(h, g1, be1, rm1, rv1))
    h = h @ w2 + b2
    h = lrelu(bn(h, g2, be2, rm2, rv2))
    z = h @ w3 + b3
    return jax.nn.sigmoid(z)


if __name__ == "__main__":
    key = jax.random.PRNGKey(0)
    k_x, k_p = jax.random.split(key)

    batch = 8
    input_dims = 32
    hidden_dims = 32
    output_dims = 2

    x = jax.random.normal(k_x, (batch, input_dims), jnp.float32)
    params = init_params(k_p, input_dims, hidden_dims, output_dims)

    # Hoisted once-per-parameter-update prep, then the hot-path apply.
    prepared = prepare_params(params)
    out = discriminator_apply(x, prepared)
    out = jax.block_until_ready(out)

    ref = reference_forward(x, params)
    assert out.shape == (batch, output_dims)
    # bf16 matmul operands / epilogues (f32 accumulation) -> looser tolerance.
    assert jnp.allclose(out, ref, atol=2e-2, rtol=2e-2), "mismatch vs reference"

    print("KERNEL_OK")
</pallas_src>

<mosaic_0001>
module attributes {stable_mosaic.version = 11 : i64} {
  func.func @_disc_kernel(%arg0: i32, %arg1: memref<16x128xbf16, #tpu.memory_space<vmem>>, %arg2: memref<128x128xbf16, #tpu.memory_space<vmem>>, %arg3: memref<1x128xbf16, #tpu.memory_space<vmem>>, %arg4: memref<128x128xbf16, #tpu.memory_space<vmem>>, %arg5: memref<1x128xbf16, #tpu.memory_space<vmem>>, %arg6: memref<128x128xbf16, #tpu.memory_space<vmem>>, %arg7: memref<1x128xf32, #tpu.memory_space<vmem>>, %arg8: memref<16x128xf32, #tpu.memory_space<vmem>>) attributes {dimension_semantics = [#tpu.dimension_semantics<parallel>], iteration_bounds = array<i64: 1>, scalar_prefetch = 0 : i64, scratch_operands = 0 : i64, tpu.core_type = #tpu.core_type<tc>, window_params = [{transform_indices = @transform_0, window_bounds = array<i64: 16, 128>}, {pipeline_mode = #tpu.pipeline_mode<synchronous>, transform_indices = @transform_1, window_bounds = array<i64: 128, 128>}, {pipeline_mode = #tpu.pipeline_mode<synchronous>, transform_indices = @transform_2, window_bounds = array<i64: 1, 128>}, {pipeline_mode = #tpu.pipeline_mode<synchronous>, transform_indices = @transform_3, window_bounds = array<i64: 128, 128>}, {pipeline_mode = #tpu.pipeline_mode<synchronous>, transform_indices = @transform_4, window_bounds = array<i64: 1, 128>}, {pipeline_mode = #tpu.pipeline_mode<synchronous>, transform_indices = @transform_5, window_bounds = array<i64: 128, 128>}, {pipeline_mode = #tpu.pipeline_mode<synchronous>, transform_indices = @transform_6, window_bounds = array<i64: 1, 128>}, {transform_indices = @transform_7, window_bounds = array<i64: 16, 128>}]} {
    %c0 = arith.constant 0 : index
    %c0_0 = arith.constant 0 : index
    %0 = vector.load %arg1[%c0, %c0_0] : memref<16x128xbf16, #tpu.memory_space<vmem>>, vector<16x128xbf16>
    %c0_1 = arith.constant 0 : index
    %c0_2 = arith.constant 0 : index
    %1 = vector.load %arg2[%c0_1, %c0_2] : memref<128x128xbf16, #tpu.memory_space<vmem>>, vector<128x128xbf16>
    %cst = arith.constant dense<0.000000e+00> : vector<16x128xf32>
    %2 = tpu.matmul %0, %1, %cst {dimension_numbers = #tpu.dot_dimension_numbers<[1], [0], [0], [1], [0, 0, 1, 1], [], []>} : vector<16x128xbf16>, vector<128x128xbf16>, vector<16x128xf32> -> vector<16x128xf32>
    %3 = arith.truncf %2 : vector<16x128xf32> to vector<16x128xbf16>
    %c0_3 = arith.constant 0 : index
    %c0_4 = arith.constant 0 : index
    %4 = vector.load %arg3[%c0_3, %c0_4] : memref<1x128xbf16, #tpu.memory_space<vmem>>, vector<1x128xbf16>
    %5 = vector.broadcast %4 : vector<1x128xbf16> to vector<16x128xbf16>
    %6 = arith.addf %3, %5 : vector<16x128xbf16>
    %cst_5 = arith.constant 0.000000e+00 : bf16
    %7 = vector.broadcast %cst_5 : bf16 to vector<16x128xbf16>
    %8 = arith.cmpf oge, %6, %7 : vector<16x128xbf16>
    %cst_6 = arith.constant 1.000980e-02 : bf16
    %9 = vector.broadcast %cst_6 : bf16 to vector<16x128xbf16>
    %10 = arith.mulf %9, %6 : vector<16x128xbf16>
    %11 = arith.select %8, %6, %10 : vector<16x128xi1>, vector<16x128xbf16>
    %c0_7 = arith.constant 0 : index
    %c0_8 = arith.constant 0 : index
    %12 = vector.load %arg4[%c0_7, %c0_8] : memref<128x128xbf16, #tpu.memory_space<vmem>>, vector<128x128xbf16>
    %cst_9 = arith.constant dense<0.000000e+00> : vector<16x128xf32>
    %13 = tpu.matmul %11, %12, %cst_9 {dimension_numbers = #tpu.dot_dimension_numbers<[1], [0], [0], [1], [0, 0, 1, 1], [], []>} : vector<16x128xbf16>, vector<128x128xbf16>, vector<16x128xf32> -> vector<16x128xf32>
    %14 = arith.truncf %13 : vector<16x128xf32> to vector<16x128xbf16>
    %c0_10 = arith.constant 0 : index
    %c0_11 = arith.constant 0 : index
    %15 = vector.load %arg5[%c0_10, %c0_11] : memref<1x128xbf16, #tpu.memory_space<vmem>>, vector<1x128xbf16>
    %16 = vector.broadcast %15 : vector<1x128xbf16> to vector<16x128xbf16>
    %17 = arith.addf %14, %16 : vector<16x128xbf16>
    %cst_12 = arith.constant 0.000000e+00 : bf16
    %18 = vector.broadcast %cst_12 : bf16 to vector<16x128xbf16>
    %19 = arith.cmpf oge, %17, %18 : vector<16x128xbf16>
    %cst_13 = arith.constant 1.000980e-02 : bf16
    %20 = vector.broadcast %cst_13 : bf16 to vector<16x128xbf16>
    %21 = arith.mulf %20, %17 : vector<16x128xbf16>
    %22 = arith.select %19, %17, %21 : vector<16x128xi1>, vector<16x128xbf16>
    %c0_14 = arith.constant 0 : index
    %c0_15 = arith.constant 0 : index
    %23 = vector.load %arg6[%c0_14, %c0_15] : memref<128x128xbf16, #tpu.memory_space<vmem>>, vector<128x128xbf16>
    %cst_16 = arith.constant dense<0.000000e+00> : vector<16x128xf32>
    %24 = tpu.matmul %22, %23, %cst_16 {dimension_numbers = #tpu.dot_dimension_numbers<[1], [0], [0], [1], [0, 0, 1, 1], [], []>} : vector<16x128xbf16>, vector<128x128xbf16>, vector<16x128xf32> -> vector<16x128xf32>
    %c0_17 = arith.constant 0 : index
    %c0_18 = arith.constant 0 : index
    %25 = vector.load %arg7[%c0_17, %c0_18] : memref<1x128xf32, #tpu.memory_space<vmem>>, vector<1x128xf32>
    %26 = vector.broadcast %25 : vector<1x128xf32> to vector<16x128xf32>
    %27 = arith.addf %24, %26 : vector<16x128xf32>
    %cst_19 = arith.constant 5.000000e-01 : f32
    %28 = vector.broadcast %cst_19 : f32 to vector<16x128xf32>
    %29 = arith.mulf %28, %27 : vector<16x128xf32>
    %30 = math.tanh %29 : vector<16x128xf32>
    %cst_20 = arith.constant 1.000000e+00 : f32
    %31 = vector.broadcast %cst_20 : f32 to vector<16x128xf32>
    %32 = arith.addf %30, %31 : vector<16x128xf32>
    %cst_21 = arith.constant 5.000000e-01 : f32
    %33 = vector.broadcast %cst_21 : f32 to vector<16x128xf32>
    %34 = arith.mulf %33, %32 : vector<16x128xf32>
    %c0_22 = arith.constant 0 : index
    %c0_23 = arith.constant 0 : index
    %35 = vector.load %arg8[%c0_22, %c0_23] : memref<16x128xf32, #tpu.memory_space<vmem>>, vector<16x128xf32>
    tpu.vector_store %arg8[%c0_22, %c0_23], %34 {strides = array<i32>} : memref<16x128xf32, #tpu.memory_space<vmem>>, vector<16x128xf32>,
    return
  }
  func.func @transform_0(%arg0: i32) -> (i32, i32) {
    %c0_i32 = arith.constant 0 : i32
    %c0_i32_0 = arith.constant 0 : i32
    return %arg0, %c0_i32 : i32, i32
  }
  func.func @transform_1(%arg0: i32) -> (i32, i32) {
    %c0_i32 = arith.constant 0 : i32
    %c0_i32_0 = arith.constant 0 : i32
    %c0_i32_1 = arith.constant 0 : i32
    return %c0_i32, %c0_i32_0 : i32, i32
  }
  func.func @transform_2(%arg0: i32) -> (i32, i32) {
    %c0_i32 = arith.constant 0 : i32
    %c0_i32_0 = arith.constant 0 : i32
    %c0_i32_1 = arith.constant 0 : i32
    return %c0_i32, %c0_i32_0 : i32, i32
  }
  func.func @transform_3(%arg0: i32) -> (i32, i32) {
    %c0_i32 = arith.constant 0 : i32
    %c0_i32_0 = arith.constant 0 : i32
    %c0_i32_1 = arith.constant 0 : i32
    return %c0_i32, %c0_i32_0 : i32, i32
  }
  func.func @transform_4(%arg0: i32) -> (i32, i32) {
    %c0_i32 = arith.constant 0 : i32
    %c0_i32_0 = arith.constant 0 : i32
    %c0_i32_1 = arith.constant 0 : i32
    return %c0_i32, %c0_i32_0 : i32, i32
  }
  func.func @transform_5(%arg0: i32) -> (i32, i32) {
    %c0_i32 = arith.constant 0 : i32
    %c0_i32_0 = arith.constant 0 : i32
    %c0_i32_1 = arith.constant 0 : i32
    return %c0_i32, %c0_i32_0 : i32, i32
  }
  func.func @transform_6(%arg0: i32) -> (i32, i32) {
    %c0_i32 = arith.constant 0 : i32
    %c0_i32_0 = arith.constant 0 : i32
    %c0_i32_1 = arith.constant 0 : i32
    return %c0_i32, %c0_i32_0 : i32, i32
  }
  func.func @transform_7(%arg0: i32) -> (i32, i32) {
    %c0_i32 = arith.constant 0 : i32
    %c0_i32_0 = arith.constant 0 : i32
    return %arg0, %c0_i32 : i32, i32
  }
}

module attributes {stable_mosaic.version = 11 : i64} {
  func.func @_disc_kernel(%arg0: i32, %arg1: memref<16x128xbf16, #tpu.memory_space<vmem>>, %arg2: memref<128x128xbf16, #tpu.memory_space<vmem>>, %arg3: memref<1x128xbf16, #tpu.memory_space<vmem>>, %arg4: memref<128x128xbf16, #tpu.memory_space<vmem>>, %arg5: memref<1x128xbf16, #tpu.memory_space<vmem>>, %arg6: memref<128x128xbf16, #tpu.memory_space<vmem>>, %arg7: memref<1x128xf32, #tpu.memory_space<vmem>>, %arg8: memref<16x128xf32, #tpu.memory_space<vmem>>) attributes {dimension_semantics = [#tpu.dimension_semantics<parallel>], iteration_bounds = array<i64: 1>, scalar_prefetch = 0 : i64, scratch_operands = 0 : i64, tpu.core_type = #tpu.core_type<tc>, window_params = [{transform_indices = @transform_0, window_bounds = array<i64: 16, 128>}, {pipeline_mode = #tpu.pipeline_mode<synchronous>, transform_indices = @transform_1, window_bounds = array<i64: 128, 128>}, {pipeline_mode = #tpu.pipeline_mode<synchronous>, transform_indices = @transform_2, window_bounds = array<i64: 1, 128>}, {pipeline_mode = #tpu.pipeline_mode<synchronous>, transform_indices = @transform_3, window_bounds = array<i64: 128, 128>}, {pipeline_mode = #tpu.pipeline_mode<synchronous>, transform_indices = @transform_4, window_bounds = array<i64: 1, 128>}, {pipeline_mode = #tpu.pipeline_mode<synchronous>, transform_indices = @transform_5, window_bounds = array<i64: 128, 128>}, {pipeline_mode = #tpu.pipeline_mode<synchronous>, transform_indices = @transform_6, window_bounds = array<i64: 1, 128>}, {transform_indices = @transform_7, window_bounds = array<i64: 16, 128>}]} {
    %c0 = arith.constant 0 : index
    %c0_0 = arith.constant 0 : index
    %0 = vector.load %arg1[%c0, %c0_0] : memref<16x128xbf16, #tpu.memory_space<vmem>>, vector<16x128xbf16>
    %c0_1 = arith.constant 0 : index
    %c0_2 = arith.constant 0 : index
    %1 = vector.load %arg2[%c0_1, %c0_2] : memref<128x128xbf16, #tpu.memory_space<vmem>>, vector<128x128xbf16>
    %cst = arith.constant dense<0.000000e+00> : vector<16x128xf32>
    %2 = tpu.matmul %0, %1, %cst {dimension_numbers = #tpu.dot_dimension_numbers<[1], [0], [0], [1], [0, 0, 1, 1], [], []>} : vector<16x128xbf16>, vector<128x128xbf16>, vector<16x128xf32> -> vector<16x128xf32>
    %3 = arith.truncf %2 : vector<16x128xf32> to vector<16x128xbf16>
    %c0_3 = arith.constant 0 : index
    %c0_4 = arith.constant 0 : index
    %4 = vector.load %arg3[%c0_3, %c0_4] : memref<1x128xbf16, #tpu.memory_space<vmem>>, vector<1x128xbf16>
    %5 = vector.broadcast %4 : vector<1x128xbf16> to vector<16x128xbf16>
    %6 = arith.addf %3, %5 : vector<16x128xbf16>
    %cst_5 = arith.constant 0.000000e+00 : bf16
    %7 = vector.broadcast %cst_5 : bf16 to vector<16x128xbf16>
    %8 = arith.cmpf oge, %6, %7 : vector<16x128xbf16>
    %cst_6 = arith.constant 1.000980e-02 : bf16
    %9 = vector.broadcast %cst_6 : bf16 to vector<16x128xbf16>
    %10 = arith.mulf %9, %6 : vector<16x128xbf16>
    %11 = arith.select %8, %6, %10 : vector<16x128xi1>, vector<16x128xbf16>
    %c0_7 = arith.constant 0 : index
    %c0_8 = arith.constant 0 : index
    %12 = vector.load %arg4[%c0_7, %c0_8] : memref<128x128xbf16, #tpu.memory_space<vmem>>, vector<128x128xbf16>
    %cst_9 = arith.constant dense<0.000000e+00> : vector<16x128xf32>
    %13 = tpu.matmul %11, %12, %cst_9 {dimension_numbers = #tpu.dot_dimension_numbers<[1], [0], [0], [1], [0, 0, 1, 1], [], []>} : vector<16x128xbf16>, vector<128x128xbf16>, vector<16x128xf32> -> vector<16x128xf32>
    %14 = arith.truncf %13 : vector<16x128xf32> to vector<16x128xbf16>
    %c0_10 = arith.constant 0 : index
    %c0_11 = arith.constant 0 : index
    %15 = vector.load %arg5[%c0_10, %c0_11] : memref<1x128xbf16, #tpu.memory_space<vmem>>, vector<1x128xbf16>
    %16 = vector.broadcast %15 : vector<1x128xbf16> to vector<16x128xbf16>
    %17 = arith.addf %14, %16 : vector<16x128xbf16>
    %cst_12 = arith.constant 0.000000e+00 : bf16
    %18 = vector.broadcast %cst_12 : bf16 to vector<16x128xbf16>
    %19 = arith.cmpf oge, %17, %18 : vector<16x128xbf16>
    %cst_13 = arith.constant 1.000980e-02 : bf16
    %20 = vector.broadcast %cst_13 : bf16 to vector<16x128xbf16>
    %21 = arith.mulf %20, %17 : vector<16x128xbf16>
    %22 = arith.select %19, %17, %21 : vector<16x128xi1>, vector<16x128xbf16>
    %c0_14 = arith.constant 0 : index
    %c0_15 = arith.constant 0 : index
    %23 = vector.load %arg6[%c0_14, %c0_15] : memref<128x128xbf16, #tpu.memory_space<vmem>>, vector<128x128xbf16>
    %cst_16 = arith.constant dense<0.000000e+00> : vector<16x128xf32>
    %24 = tpu.matmul %22, %23, %cst_16 {dimension_numbers = #tpu.dot_dimension_numbers<[1], [0], [0], [1], [0, 0, 1, 1], [], []>} : vector<16x128xbf16>, vector<128x128xbf16>, vector<16x128xf32> -> vector<16x128xf32>
    %c0_17 = arith.constant 0 : index
    %c0_18 = arith.constant 0 : index
    %25 = vector.load %arg7[%c0_17, %c0_18] : memref<1x128xf32, #tpu.memory_space<vmem>>, vector<1x128xf32>
    %26 = vector.broadcast %25 : vector<1x128xf32> to vector<16x128xf32>
    %27 = arith.addf %24, %26 : vector<16x128xf32>
    %cst_19 = arith.constant 5.000000e-01 : f32
    %28 = vector.broadcast %cst_19 : f32 to vector<16x128xf32>
    %29 = arith.mulf %28, %27 : vector<16x128xf32>
    %30 = math.tanh %29 : vector<16x128xf32>
    %cst_20 = arith.constant 1.000000e+00 : f32
    %31 = vector.broadcast %cst_20 : f32 to vector<16x128xf32>
    %32 = arith.addf %30, %31 : vector<16x128xf32>
    %cst_21 = arith.constant 5.000000e-01 : f32
    %33 = vector.broadcast %cst_21 : f32 to vector<16x128xf32>
    %34 = arith.mulf %33, %32 : vector<16x128xf32>
    %c0_22 = arith.constant 0 : index
    %c0_23 = arith.constant 0 : index
    %35 = vector.load %arg8[%c0_22, %c0_23] : memref<16x128xf32, #tpu.memory_space<vmem>>, vector<16x128xf32>
    tpu.vector_store %arg8[%c0_22, %c0_23], %34 {strides = array<i32>} : memref<16x128xf32, #tpu.memory_space<vmem>>, vector<16x128xf32>,
    return
  }
  func.func @transform_0(%arg0: i32) -> (i32, i32) {
    %c0_i32 = arith.constant 0 : i32
    %c0_i32_0 = arith.constant 0 : i32
    return %arg0, %c0_i32 : i32, i32
  }
  func.func @transform_1(%arg0: i32) -> (i32, i32) {
    %c0_i32 = arith.constant 0 : i32
    %c0_i32_0 = arith.constant 0 : i32
    %c0_i32_1 = arith.constant 0 : i32
    return %c0_i32, %c0_i32_0 : i32, i32
  }
  func.func @transform_2(%arg0: i32) -> (i32, i32) {
    %c0_i32 = arith.constant 0 : i32
    %c0_i32_0 = arith.constant 0 : i32
    %c0_i32_1 = arith.constant 0 : i32
    return %c0_i32, %c0_i32_0 : i32, i32
  }
  func.func @transform_3(%arg0: i32) -> (i32, i32) {
    %c0_i32 = arith.constant 0 : i32
    %c0_i32_0 = arith.constant 0 : i32
    %c0_i32_1 = arith.constant 0 : i32
    return %c0_i32, %c0_i32_0 : i32, i32
  }
  func.func @transform_4(%arg0: i32) -> (i32, i32) {
    %c0_i32 = arith.constant 0 : i32
    %c0_i32_0 = arith.constant 0 : i32
    %c0_i32_1 = arith.constant 0 : i32
    return %c0_i32, %c0_i32_0 : i32, i32
  }
  func.func @transform_5(%arg0: i32) -> (i32, i32) {
    %c0_i32 = arith.constant 0 : i32
    %c0_i32_0 = arith.constant 0 : i32
    %c0_i32_1 = arith.constant 0 : i32
    return %c0_i32, %c0_i32_0 : i32, i32
  }
  func.func @transform_6(%arg0: i32) -> (i32, i32) {
    %c0_i32 = arith.constant 0 : i32
    %c0_i32_0 = arith.constant 0 : i32
    %c0_i32_1 = arith.constant 0 : i32
    return %c0_i32, %c0_i32_0 : i32, i32
  }
  func.func @transform_7(%arg0: i32) -> (i32, i32) {
    %c0_i32 = arith.constant 0 : i32
    %c0_i32_0 = arith.constant 0 : i32
    return %arg0, %c0_i32 : i32, i32
  }
}

</mosaic_0001>

<llo_original>
// kernel: tpu_custom_call.1
$region0: #{tpu_custom_call.1}
  #allocation0 [shape = 'u32[]', space=smem, size = 0x4, offset = 0x4, fixed_abs, tag = 'smem constant byte address 0x4 - core index']
  #allocation1 [shape = 'u32[144,128]{1,0:T(1,128)}', space=vmem, size = 0x12000, scoped, tag = 'internal scratch']
  %s0 = inlined_call_operand.hbm [shape: bf16[16,128], index: 0, kind: input, shape index: {}]
  %s1 = inlined_call_operand.hbm [shape: bf16[128,128], index: 1, kind: input, shape index: {}]
  %s2 = inlined_call_operand.vmem [shape: bf16[1,128], index: 2, kind: input, shape index: {}]
  %s3 = inlined_call_operand.hbm [shape: bf16[128,128], index: 3, kind: input, shape index: {}]
  %s4 = inlined_call_operand.vmem [shape: bf16[1,128], index: 4, kind: input, shape index: {}]
  %s5 = inlined_call_operand.hbm [shape: bf16[128,128], index: 5, kind: input, shape index: {}]
  %s6 = inlined_call_operand.vmem [shape: f32[1,128], index: 6, kind: input, shape index: {}]
  %s7 = inlined_call_operand.hbm [shape: f32[16,128], index: 7, kind: output, shape index: {}]
  %s8 = sld [smem:[#allocation0]]
  $region54: #{tpu_custom_call.1} parent=0
    _
  %s10 = ssub.s32 1, %s8
  %s11 = scalar_select 0, %s10, %s8
  $region1: #{tpu_custom_call.1} parent=0
    #allocation2 [shape = 'u8[4096]{0}', space=vmem, size = 0x1000, scoped, tag = 'input window, operand 0, single buffered']
    #allocation3 [shape = 's32[1]{0}', space=sflag, size = 0x4, scoped, tag = 'scoped memory for tpu_custom_call.1']
    #allocation4 [shape = 's32[1]{0}', space=sflag, size = 0x4, scoped, tag = 'scoped memory for tpu_custom_call.1']
    #allocation5 [shape = 'u8[32768]{0}', space=vmem, size = 0x8000, scoped, tag = 'input window, operand 1, single buffered']
    #allocation6 [shape = 's32[1]{0}', space=sflag, size = 0x4, scoped, tag = 'scoped memory for tpu_custom_call.1']
    #allocation7 [shape = 'u8[32768]{0}', space=vmem, size = 0x8000, scoped, tag = 'input window, operand 3, single buffered']
    #allocation8 [shape = 'u8[32768]{0}', space=vmem, size = 0x8000, scoped, tag = 'input window, operand 5, single buffered']
    #allocation9 [shape = 's32[1]{0}', space=sflag, size = 0x4, scoped, tag = 'scoped memory for tpu_custom_call.1']
    #allocation10 [shape = 'u8[8192]{0}', space=vmem, size = 0x2000, scoped, tag = 'output window, operand 0, single buffered']
    %12 = vsyncpa [#allocation3], 0
    %13 = vsyncpa [#allocation6], 0
    %14 = vsyncpa [#allocation9], 0
    %15 = vsyncpa [#allocation4], 0
    // Predicated region
    $region2: #{tpu_custom_call.1} parent=1 // pred_check
      _
    $region3: #{tpu_custom_call.1} parent=1 // pred_check_branch
      %17 = sbr.rel (0) target = $region5
    $region4: #{tpu_custom_call.1} parent=1 // pred_region
      %s19 = ssub.s32 128, 128
      %20 = vsyncadd [#allocation3], %s19
      %s21 = sshll.u32 [#allocation2], 4
      %s22 = int_to_ptr.vmem [resolvable:$true] %s21
      %27 = dma.hbm_to_vmem [thread:$0]  %s0, 128, %s22, [#allocation3], 64, 64, 4
    $region5: #{tpu_custom_call.1} parent=1 // pred_fallthru
      _
    // Predicated region
    $region6: #{tpu_custom_call.1} parent=1 // pred_check
      _
    $region7: #{tpu_custom_call.1} parent=1 // pred_check_branch
      %29 = sbr.rel (0) target = $region9
    $region8: #{tpu_custom_call.1} parent=1 // pred_region
      %s31 = ssub.s32 1024, 1024
      %32 = vsyncadd [#allocation6], %s31
      %s33 = sshll.u32 [#allocation5], 4
      %s34 = int_to_ptr.vmem [resolvable:$true] %s33
      %39 = dma.hbm_to_vmem [thread:$0]  %s1, 1024, %s34, [#allocation6], 64, 64, 4
    $region9: #{tpu_custom_call.1} parent=1 // pred_fallthru
      _
    // Predicated region
    $region10: #{tpu_custom_call.1} parent=1 // pred_check
      _
    $region11: #{tpu_custom_call.1} parent=1 // pred_check_branch
      %41 = sbr.rel (0) target = $region13
    $region12: #{tpu_custom_call.1} parent=1 // pred_region
      _
    $region13: #{tpu_custom_call.1} parent=1 // pred_fallthru
      _
    // Predicated region
    $region14: #{tpu_custom_call.1} parent=1 // pred_check
      _
    $region15: #{tpu_custom_call.1} parent=1 // pred_check_branch
      %43 = sbr.rel (0) target = $region17
    $region16: #{tpu_custom_call.1} parent=1 // pred_region
      %s45 = ssub.s32 1024, 1024
      %46 = vsyncadd [#allocation6], %s45
      %s47 = sshll.u32 [#allocation7], 4
      %s48 = int_to_ptr.vmem [resolvable:$true] %s47
      %53 = dma.hbm_to_vmem [thread:$0]  %s3, 1024, %s48, [#allocation6], 64, 64, 4
    $region17: #{tpu_custom_call.1} parent=1 // pred_fallthru
      _
    // Predicated region
    $region18: #{tpu_custom_call.1} parent=1 // pred_check
      _
    $region19: #{tpu_custom_call.1} parent=1 // pred_check_branch
      %55 = sbr.rel (0) target = $region21
    $region20: #{tpu_custom_call.1} parent=1 // pred_region
      _
    $region21: #{tpu_custom_call.1} parent=1 // pred_fallthru
      _
    // Predicated region
    $region22: #{tpu_custom_call.1} parent=1 // pred_check
      _
    $region23: #{tpu_custom_call.1} parent=1 // pred_check_branch
      %57 = sbr.rel (0) target = $region25
    $region24: #{tpu_custom_call.1} parent=1 // pred_region
      %s59 = ssub.s32 1024, 1024
      %60 = vsyncadd [#allocation9], %s59
      %s61 = sshll.u32 [#allocation8], 4
      %s62 = int_to_ptr.vmem [resolvable:$true] %s61
      %67 = dma.hbm_to_vmem [thread:$0]  %s5, 1024, %s62, [#allocation9], 64, 64, 4
    $region25: #{tpu_custom_call.1} parent=1 // pred_fallthru
      _
    // Predicated region
    $region26: #{tpu_custom_call.1} parent=1 // pred_check
      _
    $region27: #{tpu_custom_call.1} parent=1 // pred_check_branch
      %69 = sbr.rel (0) target = $region29
    $region28: #{tpu_custom_call.1} parent=1 // pred_region
      _
    $region29: #{tpu_custom_call.1} parent=1 // pred_fallthru
      _
    // Predicated region
    $region30: #{tpu_custom_call.1} parent=1 // pred_check
      _
    $region31: #{tpu_custom_call.1} parent=1 // pred_check_branch
      %71 = sbr.rel (0) target = $region33
    $region32: #{tpu_custom_call.1} parent=1 // pred_region
      %72 = dma.done [#allocation3], 128
    $region33: #{tpu_custom_call.1} parent=1 // pred_fallthru
      _
    // Predicated region
    $region34: #{tpu_custom_call.1} parent=1 // pred_check
      _
    $region35: #{tpu_custom_call.1} parent=1 // pred_check_branch
      %74 = sbr.rel (0) target = $region37
    $region36: #{tpu_custom_call.1} parent=1 // pred_region
      %75 = dma.done [#allocation6], 1024
    $region37: #{tpu_custom_call.1} parent=1 // pred_fallthru
      _
    // Predicated region
    $region38: #{tpu_custom_call.1} parent=1 // pred_check
      _
    $region39: #{tpu_custom_call.1} parent=1 // pred_check_branch
      %77 = sbr.rel (0) target = $region41
    $region40: #{tpu_custom_call.1} parent=1 // pred_region
      %78 = dma.done [#allocation6], 1024
    $region41: #{tpu_custom_call.1} parent=1 // pred_fallthru
      _
    // Predicated region
    $region42: #{tpu_custom_call.1} parent=1 // pred_check
      _
    $region43: #{tpu_custom_call.1} parent=1 // pred_check_branch
      %80 = sbr.rel (0) target = $region45
    $region44: #{tpu_custom_call.1} parent=1 // pred_region
      %81 = dma.done [#allocation9], 1024
    $region45: #{tpu_custom_call.1} parent=1 // pred_fallthru
      _
    %v84 = vld [vmem:[#allocation2] sm:$0xf]
    %v85 = vld [vmem:[#allocation2 + $0x4] sm:$0xf]
    %v86 = vld [vmem:[#allocation5] sm:$0xf]
    %v87 = vld [vmem:[#allocation5 + $0x4] sm:$0xf]
    %v88 = vld [vmem:[#allocation5 + $0x8] sm:$0xf]
    %v89 = vld [vmem:[#allocation5 + $0xc] sm:$0xf]
    %v90 = vld [vmem:[#allocation5 + $0x10] sm:$0xf]
    %v91 = vld [vmem:[#allocation5 + $0x14] sm:$0xf]
    %v92 = vld [vmem:[#allocation5 + $0x18] sm:$0xf]
    %v93 = vld [vmem:[#allocation5 + $0x1c] sm:$0xf]
    %v94 = vld [vmem:[#allocation5 + $0x20] sm:$0xf]
    %v95 = vld [vmem:[#allocation5 + $0x24] sm:$0xf]
    %v96 = vld [vmem:[#allocation5 + $0x28] sm:$0xf]
    %v97 = vld [vmem:[#allocation5 + $0x2c] sm:$0xf]
    %v98 = vld [vmem:[#allocation5 + $0x30] sm:$0xf]
    %v99 = vld [vmem:[#allocation5 + $0x34] sm:$0xf]
    %v100 = vld [vmem:[#allocation5 + $0x38] sm:$0xf]
    %v101 = vld [vmem:[#allocation5 + $0x3c] sm:$0xf]
    %v104 = vunpack.c.l.b16 %v84
    %v105 = vunpack.c.l.b16 %v85
    %v106 = vpack.c.b16 %v105, %v104
    %v124 = vunpack.c.l.b16 %v86
    %v125 = vunpack.c.l.b16 %v87
    %v126 = vunpack.c.l.b16 %v88
    %v127 = vunpack.c.l.b16 %v89
    %v128 = vunpack.c.l.b16 %v90
    %v129 = vunpack.c.l.b16 %v91
    %v130 = vunpack.c.l.b16 %v92
    %v131 = vunpack.c.l.b16 %v93
    %v132 = vunpack.c.l.b16 %v94
    %v133 = vunpack.c.l.b16 %v95
    %v134 = vunpack.c.l.b16 %v96
    %v135 = vunpack.c.l.b16 %v97
    %v136 = vunpack.c.l.b16 %v98
    %v137 = vunpack.c.l.b16 %v99
    %v138 = vunpack.c.l.b16 %v100
    %v139 = vunpack.c.l.b16 %v101
    %v140 = vpack.c.b16 %v125, %v124
    %v141 = vpack.c.b16 %v127, %v126
    %v142 = vpack.c.b16 %v129, %v128
    %v143 = vpack.c.b16 %v131, %v130
    %v144 = vpack.c.b16 %v133, %v132
    %v145 = vpack.c.b16 %v135, %v134
    %v146 = vpack.c.b16 %v137, %v136
    %v147 = vpack.c.b16 %v139, %v138
    %156 = vmatprep.subr.bf16.mxu0 0
    %157 = vmatpush1.bf16.msra.mxu0 %v140
    %158 = vmatprep.subr.bf16.mxu0 0
    %159 = vmatpush1.bf16.msra.mxu0 %v141
    %160 = vmatprep.subr.bf16.mxu0 0
    %161 = vmatpush1.bf16.msra.mxu0 %v142
    %162 = vmatprep.subr.bf16.mxu0 0
    %163 = vmatpush1.bf16.msra.mxu0 %v143
    %164 = vmatprep.subr.bf16.mxu0 0
    %165 = vmatpush1.bf16.msra.mxu0 %v144
    %166 = vmatprep.subr.bf16.mxu0 0
    %167 = vmatpush1.bf16.msra.mxu0 %v145
    %168 = vmatprep.subr.bf16.mxu0 0
    %169 = vmatpush1.bf16.msra.mxu0 %v146
    %170 = vmatprep.subr.bf16.mxu0 0
    %171 = vmatpush1.bf16.msra.mxu0 %v147
    %172 = vmatprep.subr.bf16.mxu0 0
    %173 = vmatpush1.bf16.msra.mxu0 0
    %174 = vmatprep.subr.bf16.mxu0 0
    %175 = vmatpush1.bf16.msra.mxu0 0
    %176 = vmatprep.subr.bf16.mxu0 0
    %177 = vmatpush1.bf16.msra.mxu0 0
    %178 = vmatprep.subr.bf16.mxu0 0
    %179 = vmatpush1.bf16.msra.mxu0 0
    %180 = vmatprep.subr.bf16.mxu0 0
    %181 = vmatpush1.bf16.msra.mxu0 0
    %182 = vmatprep.subr.bf16.mxu0 0
    %183 = vmatpush1.bf16.msra.mxu0 0
    %184 = vmatprep.subr.bf16.mxu0 0
    %185 = vmatpush1.bf16.msra.mxu0 0
    %186 = vmatprep.subr.bf16.mxu0 0
    %187 = vmatpush1.bf16.msra.mxu0 0
    %188 = vmatprep.mubr.bf16.mxu0 0
    %189 = vmatmul.mubr.bf16.gmra.mrb[0].mxu0 %v106
    %v190 = vpop.f32.mrb[0].mxu0
    %v191 = vadd.f32 0.0, %v190
    %v192 = vpop.f32.mrb[0].mxu0
    %v193 = vpop.f32.mrb[0].mxu0
    %v194 = vadd.f32 0.0, %v193
    %v195 = vpop.f32.mrb[0].mxu0
    %196 = vdwg.mxu0
    %v197 = vpack.c.bf16 %v194, %v191
    %v198 = vld [vmem:[%s2] sm:$0x1]
    %v200 = vpack.i.b16 %v198, %v198
    %v202 = vlaneseq
    %v203 = vshrl.u32 %v202, 7
    %v204 = vsub.s32 0, %v203
    %v205 = vrot.slane %v200, %v204
    %v206 = vadd.bf16 %v197, %v205
    %vm207 = vcmp.ge.bf16.partialorder %v206, 0
    %v208 = vmul.bf16 %v206, 1009007652
    %v209 = vsel %vm207, %v206, %v208
    %v210 = vld [vmem:[#allocation7] sm:$0xf]
    %v211 = vld [vmem:[#allocation7 + $0x4] sm:$0xf]
    %v212 = vld [vmem:[#allocation7 + $0x8] sm:$0xf]
    %v213 = vld [vmem:[#allocation7 + $0xc] sm:$0xf]
    %v214 = vld [vmem:[#allocation7 + $0x10] sm:$0xf]
    %v215 = vld [vmem:[#allocation7 + $0x14] sm:$0xf]
    %v216 = vld [vmem:[#allocation7 + $0x18] sm:$0xf]
    %v217 = vld [vmem:[#allocation7 + $0x1c] sm:$0xf]
    %v218 = vld [vmem:[#allocation7 + $0x20] sm:$0xf]
    %v219 = vld [vmem:[#allocation7 + $0x24] sm:$0xf]
    %v220 = vld [vmem:[#allocation7 + $0x28] sm:$0xf]
    %v221 = vld [vmem:[#allocation7 + $0x2c] sm:$0xf]
    %v222 = vld [vmem:[#allocation7 + $0x30] sm:$0xf]
    %v223 = vld [vmem:[#allocation7 + $0x34] sm:$0xf]
    %v224 = vld [vmem:[#allocation7 + $0x38] sm:$0xf]
    %v225 = vld [vmem:[#allocation7 + $0x3c] sm:$0xf]
    %v242 = vunpack.c.l.b16 %v210
    %v243 = vunpack.c.l.b16 %v211
    %v244 = vunpack.c.l.b16 %v212
    %v245 = vunpack.c.l.b16 %v213
    %v246 = vunpack.c.l.b16 %v214
    %v247 = vunpack.c.l.b16 %v215
    %v248 = vunpack.c.l.b16 %v216
    %v249 = vunpack.c.l.b16 %v217
    %v250 = vunpack.c.l.b16 %v218
    %v251 = vunpack.c.l.b16 %v219
    %v252 = vunpack.c.l.b16 %v220
    %v253 = vunpack.c.l.b16 %v221
    %v254 = vunpack.c.l.b16 %v222
    %v255 = vunpack.c.l.b16 %v223
    %v256 = vunpack.c.l.b16 %v224
    %v257 = vunpack.c.l.b16 %v225
    %v258 = vpack.c.b16 %v243, %v242
    %v259 = vpack.c.b16 %v245, %v244
    %v260 = vpack.c.b16 %v247, %v246
    %v261 = vpack.c.b16 %v249, %v248
    %v262 = vpack.c.b16 %v251, %v250
    %v263 = vpack.c.b16 %v253, %v252
    %v264 = vpack.c.b16 %v255, %v254
    %v265 = vpack.c.b16 %v257, %v256
    %274 = vmatprep.subr.bf16.mxu0 0
    %275 = vmatpush1.bf16.msra.mxu0 %v258
    %276 = vmatprep.subr.bf16.mxu0 0
    %277 = vmatpush1.bf16.msra.mxu0 %v259
    %278 = vmatprep.subr.bf16.mxu0 0
    %279 = vmatpush1.bf16.msra.mxu0 %v260
    %280 = vmatprep.subr.bf16.mxu0 0
    %281 = vmatpush1.bf16.msra.mxu0 %v261
    %282 = vmatprep.subr.bf16.mxu0 0
    %283 = vmatpush1.bf16.msra.mxu0 %v262
    %284 = vmatprep.subr.bf16.mxu0 0
    %285 = vmatpush1.bf16.msra.mxu0 %v263
    %286 = vmatprep.subr.bf16.mxu0 0
    %287 = vmatpush1.bf16.msra.mxu0 %v264
    %288 = vmatprep.subr.bf16.mxu0 0
    %289 = vmatpush1.bf16.msra.mxu0 %v265
    %290 = vmatprep.subr.bf16.mxu0 0
    %291 = vmatpush1.bf16.msra.mxu0 0
    %292 = vmatprep.subr.bf16.mxu0 0
    %293 = vmatpush1.bf16.msra.mxu0 0
    %294 = vmatprep.subr.bf16.mxu0 0
    %295 = vmatpush1.bf16.msra.mxu0 0
    %296 = vmatprep.subr.bf16.mxu0 0
    %297 = vmatpush1.bf16.msra.mxu0 0
    %298 = vmatprep.subr.bf16.mxu0 0
    %299 = vmatpush1.bf16.msra.mxu0 0
    %300 = vmatprep.subr.bf16.mxu0 0
    %301 = vmatpush1.bf16.msra.mxu0 0
    %302 = vmatprep.subr.bf16.mxu0 0
    %303 = vmatpush1.bf16.msra.mxu0 0
    %304 = vmatprep.subr.bf16.mxu0 0
    %305 = vmatpush1.bf16.msra.mxu0 0
    %306 = vmatprep.mubr.bf16.mxu0 0
    %307 = vmatmul.mubr.bf16.gmra.mrb[0].mxu0 %v209
    %v308 = vpop.f32.mrb[0].mxu0
    %v309 = vadd.f32 0.0, %v308
    %v310 = vpop.f32.mrb[0].mxu0
    %v311 = vpop.f32.mrb[0].mxu0
    %v312 = vadd.f32 0.0, %v311
    %v313 = vpop.f32.mrb[0].mxu0
    %314 = vdwg.mxu0
    %v315 = vpack.c.bf16 %v312, %v309
    %v316 = vld [vmem:[%s4] sm:$0x1]
    %v318 = vpack.i.b16 %v316, %v316
    %v320 = vlaneseq
    %v321 = vshrl.u32 %v320, 7
    %v322 = vsub.s32 0, %v321
    %v323 = vrot.slane %v318, %v322
    %v324 = vadd.bf16 %v315, %v323
    %vm325 = vcmp.ge.bf16.partialorder %v324, 0
    %v326 = vmul.bf16 %v324, 1009007652
    %v327 = vsel %vm325, %v324, %v326
    %v328 = vld [vmem:[#allocation8] sm:$0xf]
    %v329 = vld [vmem:[#allocation8 + $0x4] sm:$0xf]
    %v330 = vld [vmem:[#allocation8 + $0x8] sm:$0xf]
    %v331 = vld [vmem:[#allocation8 + $0xc] sm:$0xf]
    %v332 = vld [vmem:[#allocation8 + $0x10] sm:$0xf]
    %v333 = vld [vmem:[#allocation8 + $0x14] sm:$0xf]
    %v334 = vld [vmem:[#allocation8 + $0x18] sm:$0xf]
    %v335 = vld [vmem:[#allocation8 + $0x1c] sm:$0xf]
    %v336 = vld [vmem:[#allocation8 + $0x20] sm:$0xf]
    %v337 = vld [vmem:[#allocation8 + $0x24] sm:$0xf]
    %v338 = vld [vmem:[#allocation8 + $0x28] sm:$0xf]
    %v339 = vld [vmem:[#allocation8 + $0x2c] sm:$0xf]
    %v340 = vld [vmem:[#allocation8 + $0x30] sm:$0xf]
    %v341 = vld [vmem:[#allocation8 + $0x34] sm:$0xf]
    %v342 = vld [vmem:[#allocation8 + $0x38] sm:$0xf]
    %v343 = vld [vmem:[#allocation8 + $0x3c] sm:$0xf]
    %v344 = vld [vmem:[%s6] sm:$0x1]
    %v346 = vlaneseq
    %v347 = vshrl.u32 %v346, 7
    %v348 = vsub.s32 0, %v347
    %v349 = vrot.slane %v344, %v348
    %v367 = vunpack.c.l.b16 %v328
    %v368 = vunpack.c.l.b16 %v329
    %v369 = vunpack.c.l.b16 %v330
    %v370 = vunpack.c.l.b16 %v331
    %v371 = vunpack.c.l.b16 %v332
    %v372 = vunpack.c.l.b16 %v333
    %v373 = vunpack.c.l.b16 %v334
    %v374 = vunpack.c.l.b16 %v335
    %v375 = vunpack.c.l.b16 %v336
    %v376 = vunpack.c.l.b16 %v337
    %v377 = vunpack.c.l.b16 %v338
    %v378 = vunpack.c.l.b16 %v339
    %v379 = vunpack.c.l.b16 %v340
    %v380 = vunpack.c.l.b16 %v341
    %v381 = vunpack.c.l.b16 %v342
    %v382 = vunpack.c.l.b16 %v343
    %v383 = vpack.c.b16 %v368, %v367
    %v384 = vpack.c.b16 %v370, %v369
    %v385 = vpack.c.b16 %v372, %v371
    %v386 = vpack.c.b16 %v374, %v373
    %v387 = vpack.c.b16 %v376, %v375
    %v388 = vpack.c.b16 %v378, %v377
    %v389 = vpack.c.b16 %v380, %v379
    %v390 = vpack.c.b16 %v382, %v381
    %399 = vmatprep.subr.bf16.mxu0 0
    %400 = vmatpush1.bf16.msra.mxu0 %v383
    %401 = vmatprep.subr.bf16.mxu0 0
    %402 = vmatpush1.bf16.msra.mxu0 %v384
    %403 = vmatprep.subr.bf16.mxu0 0
    %404 = vmatpush1.bf16.msra.mxu0 %v385
    %405 = vmatprep.subr.bf16.mxu0 0
    %406 = vmatpush1.bf16.msra.mxu0 %v386
    %407 = vmatprep.subr.bf16.mxu0 0
    %408 = vmatpush1.bf16.msra.mxu0 %v387
    %409 = vmatprep.subr.bf16.mxu0 0
    %410 = vmatpush1.bf16.msra.mxu0 %v388
    %411 = vmatprep.subr.bf16.mxu0 0
    %412 = vmatpush1.bf16.msra.mxu0 %v389
    %413 = vmatprep.subr.bf16.mxu0 0
    %414 = vmatpush1.bf16.msra.mxu0 %v390
    %415 = vmatprep.subr.bf16.mxu0 0
    %416 = vmatpush1.bf16.msra.mxu0 0
    %417 = vmatprep.subr.bf16.mxu0 0
    %418 = vmatpush1.bf16.msra.mxu0 0
    %419 = vmatprep.subr.bf16.mxu0 0
    %420 = vmatpush1.bf16.msra.mxu0 0
    %421 = vmatprep.subr.bf16.mxu0 0
    %422 = vmatpush1.bf16.msra.mxu0 0
    %423 = vmatprep.subr.bf16.mxu0 0
    %424 = vmatpush1.bf16.msra.mxu0 0
    %425 = vmatprep.subr.bf16.mxu0 0
    %426 = vmatpush1.bf16.msra.mxu0 0
    %427 = vmatprep.subr.bf16.mxu0 0
    %428 = vmatpush1.bf16.msra.mxu0 0
    %429 = vmatprep.subr.bf16.mxu0 0
    %430 = vmatpush1.bf16.msra.mxu0 0
    %431 = vmatprep.mubr.bf16.mxu0 0
    %432 = vmatmul.mubr.bf16.gmra.mrb[0].mxu0 %v327
    %v433 = vpop.f32.mrb[0].mxu0
    %v434 = vadd.f32 %v349, %v433
    %v435 = vpop.f32.mrb[0].mxu0
    %v436 = vpop.f32.mrb[0].mxu0
    %v437 = vadd.f32 %v349, %v436
    %v438 = vpop.f32.mrb[0].mxu0
    %439 = vdwg.mxu0
    %v440 = vmul.f32 %v434, 0.5
    %v441 = vmul.f32 %v437, 0.5
    %v442 = vtanh.pop %v440
    %v443 = vtanh.pop %v441
    %v444 = vadd.f32 %v442, 1.0
    %v445 = vadd.f32 %v443, 1.0
    %v446 = vmul.f32 %v444, 0.5
    %v447 = vmul.f32 %v445, 0.5
    %448 = vst [vmem:[#allocation10] sm:$0xff] %v446
    %449 = vst [vmem:[#allocation10 + $0x8] sm:$0xff] %v447
    // Predicated region
    $region46: #{tpu_custom_call.1} parent=1 // pred_check
      _
    $region47: #{tpu_custom_call.1} parent=1 // pred_check_branch
      %451 = sbr.rel (0) target = $region49
    $region48: #{tpu_custom_call.1} parent=1 // pred_region
      %s453 = ssub.s32 256, 256
      %454 = vsyncadd [#allocation4], %s453
      %s455 = sshll.u32 [#allocation10], 4
      %s456 = int_to_ptr.vmem [resolvable:$true] %s455
      %461 = dma.vmem_to_hbm [thread:$0]  %s456, 256, %s7, [#allocation4], 128, 128, 8
    $region49: #{tpu_custom_call.1} parent=1 // pred_fallthru
      _
    // Predicated region
    $region50: #{tpu_custom_call.1} parent=1 // pred_check
      _
    $region51: #{tpu_custom_call.1} parent=1 // pred_check_branch
      %463 = sbr.rel (0) target = $region53
    $region52: #{tpu_custom_call.1} parent=1 // pred_region
      %464 = dma.done [#allocation4], 256
    $region53: #{tpu_custom_call.1} parent=1 // pred_fallthru
      _
    %465 = vsyncpa [#allocation3], 1
    %466 = vsyncpa [#allocation6], 1
    %467 = vsyncpa [#allocation9], 1
    %468 = vsyncpa [#allocation4], 1

// kernel: tpu_custom_call.1
$region0: #{tpu_custom_call.1}
  #allocation0 [shape = 'u32[]', space=smem, size = 0x4, offset = 0x4, fixed_abs, tag = 'smem constant byte address 0x4 - core index']
  #allocation1 [shape = 'u32[144,128]{1,0:T(1,128)}', space=vmem, size = 0x12000, scoped, tag = 'internal scratch']
  %s0 = inlined_call_operand.hbm [shape: bf16[16,128], index: 0, kind: input, shape index: {}]
  %s1 = inlined_call_operand.hbm [shape: bf16[128,128], index: 1, kind: input, shape index: {}]
  %s2 = inlined_call_operand.vmem [shape: bf16[1,128], index: 2, kind: input, shape index: {}]
  %s3 = inlined_call_operand.hbm [shape: bf16[128,128], index: 3, kind: input, shape index: {}]
  %s4 = inlined_call_operand.vmem [shape: bf16[1,128], index: 4, kind: input, shape index: {}]
  %s5 = inlined_call_operand.hbm [shape: bf16[128,128], index: 5, kind: input, shape index: {}]
  %s6 = inlined_call_operand.vmem [shape: f32[1,128], index: 6, kind: input, shape index: {}]
  %s7 = inlined_call_operand.hbm [shape: f32[16,128], index: 7, kind: output, shape index: {}]
  %s8 = sld [smem:[#allocation0]]
  $region54: #{tpu_custom_call.1} parent=0
    _
  %s10 = ssub.s32 1, %s8
  %s11 = scalar_select 0, %s10, %s8
  $region1: #{tpu_custom_call.1} parent=0
    #allocation2 [shape = 'u8[4096]{0}', space=vmem, size = 0x1000, scoped, tag = 'input window, operand 0, single buffered']
    #allocation3 [shape = 's32[1]{0}', space=sflag, size = 0x4, scoped, tag = 'scoped memory for tpu_custom_call.1']
    #allocation4 [shape = 's32[1]{0}', space=sflag, size = 0x4, scoped, tag = 'scoped memory for tpu_custom_call.1']
    #allocation5 [shape = 'u8[32768]{0}', space=vmem, size = 0x8000, scoped, tag = 'input window, operand 1, single buffered']
    #allocation6 [shape = 's32[1]{0}', space=sflag, size = 0x4, scoped, tag = 'scoped memory for tpu_custom_call.1']
    #allocation7 [shape = 'u8[32768]{0}', space=vmem, size = 0x8000, scoped, tag = 'input window, operand 3, single buffered']
    #allocation8 [shape = 'u8[32768]{0}', space=vmem, size = 0x8000, scoped, tag = 'input window, operand 5, single buffered']
    #allocation9 [shape = 's32[1]{0}', space=sflag, size = 0x4, scoped, tag = 'scoped memory for tpu_custom_call.1']
    #allocation10 [shape = 'u8[8192]{0}', space=vmem, size = 0x2000, scoped, tag = 'output window, operand 0, single buffered']
    %12 = vsyncpa [#allocation3], 0
    %13 = vsyncpa [#allocation6], 0
    %14 = vsyncpa [#allocation9], 0
    %15 = vsyncpa [#allocation4], 0
    // Predicated region
    $region2: #{tpu_custom_call.1} parent=1 // pred_check
      _
    $region3: #{tpu_custom_call.1} parent=1 // pred_check_branch
      %17 = sbr.rel (0) target = $region5
    $region4: #{tpu_custom_call.1} parent=1 // pred_region
      %s19 = ssub.s32 128, 128
      %20 = vsyncadd [#allocation3], %s19
      %s21 = sshll.u32 [#allocation2], 4
      %s22 = int_to_ptr.vmem [resolvable:$true] %s21
      %27 = dma.hbm_to_vmem [thread:$0]  %s0, 128, %s22, [#allocation3], 64, 64, 4
    $region5: #{tpu_custom_call.1} parent=1 // pred_fallthru
      _
    // Predicated region
    $region6: #{tpu_custom_call.1} parent=1 // pred_check
      _
    $region7: #{tpu_custom_call.1} parent=1 // pred_check_branch
      %29 = sbr.rel (0) target = $region9
    $region8: #{tpu_custom_call.1} parent=1 // pred_region
      %s31 = ssub.s32 1024, 1024
      %32 = vsyncadd [#allocation6], %s31
      %s33 = sshll.u32 [#allocation5], 4
      %s34 = int_to_ptr.vmem [resolvable:$true] %s33
      %39 = dma.hbm_to_vmem [thread:$0]  %s1, 1024, %s34, [#allocation6], 64, 64, 4
    $region9: #{tpu_custom_call.1} parent=1 // pred_fallthru
      _
    // Predicated region
    $region10: #{tpu_custom_call.1} parent=1 // pred_check
      _
    $region11: #{tpu_custom_call.1} parent=1 // pred_check_branch
      %41 = sbr.rel (0) target = $region13
    $region12: #{tpu_custom_call.1} parent=1 // pred_region
      _
    $region13: #{tpu_custom_call.1} parent=1 // pred_fallthru
      _
    // Predicated region
    $region14: #{tpu_custom_call.1} parent=1 // pred_check
      _
    $region15: #{tpu_custom_call.1} parent=1 // pred_check_branch
      %43 = sbr.rel (0) target = $region17
    $region16: #{tpu_custom_call.1} parent=1 // pred_region
      %s45 = ssub.s32 1024, 1024
      %46 = vsyncadd [#allocation6], %s45
      %s47 = sshll.u32 [#allocation7], 4
      %s48 = int_to_ptr.vmem [resolvable:$true] %s47
      %53 = dma.hbm_to_vmem [thread:$0]  %s3, 1024, %s48, [#allocation6], 64, 64, 4
    $region17: #{tpu_custom_call.1} parent=1 // pred_fallthru
      _
    // Predicated region
    $region18: #{tpu_custom_call.1} parent=1 // pred_check
      _
    $region19: #{tpu_custom_call.1} parent=1 // pred_check_branch
      %55 = sbr.rel (0) target = $region21
    $region20: #{tpu_custom_call.1} parent=1 // pred_region
      _
    $region21: #{tpu_custom_call.1} parent=1 // pred_fallthru
      _
    // Predicated region
    $region22: #{tpu_custom_call.1} parent=1 // pred_check
      _
    $region23: #{tpu_custom_call.1} parent=1 // pred_check_branch
      %57 = sbr.rel (0) target = $region25
    $region24: #{tpu_custom_call.1} parent=1 // pred_region
      %s59 = ssub.s32 1024, 1024
      %60 = vsyncadd [#allocation9], %s59
      %s61 = sshll.u32 [#allocation8], 4
      %s62 = int_to_ptr.vmem [resolvable:$true] %s61
      %67 = dma.hbm_to_vmem [thread:$0]  %s5, 1024, %s62, [#allocation9], 64, 64, 4
    $region25: #{tpu_custom_call.1} parent=1 // pred_fallthru
      _
    // Predicated region
    $region26: #{tpu_custom_call.1} parent=1 // pred_check
      _
    $region27: #{tpu_custom_call.1} parent=1 // pred_check_branch
      %69 = sbr.rel (0) target = $region29
    $region28: #{tpu_custom_call.1} parent=1 // pred_region
      _
    $region29: #{tpu_custom_call.1} parent=1 // pred_fallthru
      _
    // Predicated region
    $region30: #{tpu_custom_call.1} parent=1 // pred_check
      _
    $region31: #{tpu_custom_call.1} parent=1 // pred_check_branch
      %71 = sbr.rel (0) target = $region33
    $region32: #{tpu_custom_call.1} parent=1 // pred_region
      %72 = dma.done [#allocation3], 128
    $region33: #{tpu_custom_call.1} parent=1 // pred_fallthru
      _
    // Predicated region
    $region34: #{tpu_custom_call.1} parent=1 // pred_check
      _
    $region35: #{tpu_custom_call.1} parent=1 // pred_check_branch
      %74 = sbr.rel (0) target = $region37
    $region36: #{tpu_custom_call.1} parent=1 // pred_region
      %75 = dma.done [#allocation6], 1024
    $region37: #{tpu_custom_call.1} parent=1 // pred_fallthru
      _
    // Predicated region
    $region38: #{tpu_custom_call.1} parent=1 // pred_check
      _
    $region39: #{tpu_custom_call.1} parent=1 // pred_check_branch
      %77 = sbr.rel (0) target = $region41
    $region40: #{tpu_custom_call.1} parent=1 // pred_region
      %78 = dma.done [#allocation6], 1024
    $region41: #{tpu_custom_call.1} parent=1 // pred_fallthru
      _
    // Predicated region
    $region42: #{tpu_custom_call.1} parent=1 // pred_check
      _
    $region43: #{tpu_custom_call.1} parent=1 // pred_check_branch
      %80 = sbr.rel (0) target = $region45
    $region44: #{tpu_custom_call.1} parent=1 // pred_region
      %81 = dma.done [#allocation9], 1024
    $region45: #{tpu_custom_call.1} parent=1 // pred_fallthru
      _
    %v84 = vld [vmem:[#allocation2] sm:$0xf]
    %v85 = vld [vmem:[#allocation2 + $0x4] sm:$0xf]
    %v86 = vld [vmem:[#allocation5] sm:$0xf]
    %v87 = vld [vmem:[#allocation5 + $0x4] sm:$0xf]
    %v88 = vld [vmem:[#allocation5 + $0x8] sm:$0xf]
    %v89 = vld [vmem:[#allocation5 + $0xc] sm:$0xf]
    %v90 = vld [vmem:[#allocation5 + $0x10] sm:$0xf]
    %v91 = vld [vmem:[#allocation5 + $0x14] sm:$0xf]
    %v92 = vld [vmem:[#allocation5 + $0x18] sm:$0xf]
    %v93 = vld [vmem:[#allocation5 + $0x1c] sm:$0xf]
    %v94 = vld [vmem:[#allocation5 + $0x20] sm:$0xf]
    %v95 = vld [vmem:[#allocation5 + $0x24] sm:$0xf]
    %v96 = vld [vmem:[#allocation5 + $0x28] sm:$0xf]
    %v97 = vld [vmem:[#allocation5 + $0x2c] sm:$0xf]
    %v98 = vld [vmem:[#allocation5 + $0x30] sm:$0xf]
    %v99 = vld [vmem:[#allocation5 + $0x34] sm:$0xf]
    %v100 = vld [vmem:[#allocation5 + $0x38] sm:$0xf]
    %v101 = vld [vmem:[#allocation5 + $0x3c] sm:$0xf]
    %v104 = vunpack.c.l.b16 %v84
    %v105 = vunpack.c.l.b16 %v85
    %v106 = vpack.c.b16 %v105, %v104
    %v124 = vunpack.c.l.b16 %v86
    %v125 = vunpack.c.l.b16 %v87
    %v126 = vunpack.c.l.b16 %v88
    %v127 = vunpack.c.l.b16 %v89
    %v128 = vunpack.c.l.b16 %v90
    %v129 = vunpack.c.l.b16 %v91
    %v130 = vunpack.c.l.b16 %v92
    %v131 = vunpack.c.l.b16 %v93
    %v132 = vunpack.c.l.b16 %v94
    %v133 = vunpack.c.l.b16 %v95
    %v134 = vunpack.c.l.b16 %v96
    %v135 = vunpack.c.l.b16 %v97
    %v136 = vunpack.c.l.b16 %v98
    %v137 = vunpack.c.l.b16 %v99
    %v138 = vunpack.c.l.b16 %v100
    %v139 = vunpack.c.l.b16 %v101
    %v140 = vpack.c.b16 %v125, %v124
    %v141 = vpack.c.b16 %v127, %v126
    %v142 = vpack.c.b16 %v129, %v128
    %v143 = vpack.c.b16 %v131, %v130
    %v144 = vpack.c.b16 %v133, %v132
    %v145 = vpack.c.b16 %v135, %v134
    %v146 = vpack.c.b16 %v137, %v136
    %v147 = vpack.c.b16 %v139, %v138
    %156 = vmatprep.subr.bf16.mxu0 0
    %157 = vmatpush1.bf16.msra.mxu0 %v140
    %158 = vmatprep.subr.bf16.mxu0 0
    %159 = vmatpush1.bf16.msra.mxu0 %v141
    %160 = vmatprep.subr.bf16.mxu0 0
    %161 = vmatpush1.bf16.msra.mxu0 %v142
    %162 = vmatprep.subr.bf16.mxu0 0
    %163 = vmatpush1.bf16.msra.mxu0 %v143
    %164 = vmatprep.subr.bf16.mxu0 0
    %165 = vmatpush1.bf16.msra.mxu0 %v144
    %166 = vmatprep.subr.bf16.mxu0 0
    %167 = vmatpush1.bf16.msra.mxu0 %v145
    %168 = vmatprep.subr.bf16.mxu0 0
    %169 = vmatpush1.bf16.msra.mxu0 %v146
    %170 = vmatprep.subr.bf16.mxu0 0
    %171 = vmatpush1.bf16.msra.mxu0 %v147
    %172 = vmatprep.subr.bf16.mxu0 0
    %173 = vmatpush1.bf16.msra.mxu0 0
    %174 = vmatprep.subr.bf16.mxu0 0
    %175 = vmatpush1.bf16.msra.mxu0 0
    %176 = vmatprep.subr.bf16.mxu0 0
    %177 = vmatpush1.bf16.msra.mxu0 0
    %178 = vmatprep.subr.bf16.mxu0 0
    %179 = vmatpush1.bf16.msra.mxu0 0
    %180 = vmatprep.subr.bf16.mxu0 0
    %181 = vmatpush1.bf16.msra.mxu0 0
    %182 = vmatprep.subr.bf16.mxu0 0
    %183 = vmatpush1.bf16.msra.mxu0 0
    %184 = vmatprep.subr.bf16.mxu0 0
    %185 = vmatpush1.bf16.msra.mxu0 0
    %186 = vmatprep.subr.bf16.mxu0 0
    %187 = vmatpush1.bf16.msra.mxu0 0
    %188 = vmatprep.mubr.bf16.mxu0 0
    %189 = vmatmul.mubr.bf16.gmra.mrb[0].mxu0 %v106
    %v190 = vpop.f32.mrb[0].mxu0
    %v191 = vadd.f32 0.0, %v190
    %v192 = vpop.f32.mrb[0].mxu0
    %v193 = vpop.f32.mrb[0].mxu0
    %v194 = vadd.f32 0.0, %v193
    %v195 = vpop.f32.mrb[0].mxu0
    %196 = vdwg.mxu0
    %v197 = vpack.c.bf16 %v194, %v191
    %v198 = vld [vmem:[%s2] sm:$0x1]
    %v200 = vpack.i.b16 %v198, %v198
    %v202 = vlaneseq
    %v203 = vshrl.u32 %v202, 7
    %v204 = vsub.s32 0, %v203
    %v205 = vrot.slane %v200, %v204
    %v206 = vadd.bf16 %v197, %v205
    %vm207 = vcmp.ge.bf16.partialorder %v206, 0
    %v208 = vmul.bf16 %v206, 1009007652
    %v209 = vsel %vm207, %v206, %v208
    %v210 = vld [vmem:[#allocation7] sm:$0xf]
    %v211 = vld [vmem:[#allocation7 + $0x4] sm:$0xf]
    %v212 = vld [vmem:[#allocation7 + $0x8] sm:$0xf]
    %v213 = vld [vmem:[#allocation7 + $0xc] sm:$0xf]
    %v214 = vld [vmem:[#allocation7 + $0x10] sm:$0xf]
    %v215 = vld [vmem:[#allocation7 + $0x14] sm:$0xf]
    %v216 = vld [vmem:[#allocation7 + $0x18] sm:$0xf]
    %v217 = vld [vmem:[#allocation7 + $0x1c] sm:$0xf]
    %v218 = vld [vmem:[#allocation7 + $0x20] sm:$0xf]
    %v219 = vld [vmem:[#allocation7 + $0x24] sm:$0xf]
    %v220 = vld [vmem:[#allocation7 + $0x28] sm:$0xf]
    %v221 = vld [vmem:[#allocation7 + $0x2c] sm:$0xf]
    %v222 = vld [vmem:[#allocation7 + $0x30] sm:$0xf]
    %v223 = vld [vmem:[#allocation7 + $0x34] sm:$0xf]
    %v224 = vld [vmem:[#allocation7 + $0x38] sm:$0xf]
    %v225 = vld [vmem:[#allocation7 + $0x3c] sm:$0xf]
    %v242 = vunpack.c.l.b16 %v210
    %v243 = vunpack.c.l.b16 %v211
    %v244 = vunpack.c.l.b16 %v212
    %v245 = vunpack.c.l.b16 %v213
    %v246 = vunpack.c.l.b16 %v214
    %v247 = vunpack.c.l.b16 %v215
    %v248 = vunpack.c.l.b16 %v216
    %v249 = vunpack.c.l.b16 %v217
    %v250 = vunpack.c.l.b16 %v218
    %v251 = vunpack.c.l.b16 %v219
    %v252 = vunpack.c.l.b16 %v220
    %v253 = vunpack.c.l.b16 %v221
    %v254 = vunpack.c.l.b16 %v222
    %v255 = vunpack.c.l.b16 %v223
    %v256 = vunpack.c.l.b16 %v224
    %v257 = vunpack.c.l.b16 %v225
    %v258 = vpack.c.b16 %v243, %v242
    %v259 = vpack.c.b16 %v245, %v244
    %v260 = vpack.c.b16 %v247, %v246
    %v261 = vpack.c.b16 %v249, %v248
    %v262 = vpack.c.b16 %v251, %v250
    %v263 = vpack.c.b16 %v253, %v252
    %v264 = vpack.c.b16 %v255, %v254
    %v265 = vpack.c.b16 %v257, %v256
    %274 = vmatprep.subr.bf16.mxu0 0
    %275 = vmatpush1.bf16.msra.mxu0 %v258
    %276 = vmatprep.subr.bf16.mxu0 0
    %277 = vmatpush1.bf16.msra.mxu0 %v259
    %278 = vmatprep.subr.bf16.mxu0 0
    %279 = vmatpush1.bf16.msra.mxu0 %v260
    %280 = vmatprep.subr.bf16.mxu0 0
    %281 = vmatpush1.bf16.msra.mxu0 %v261
    %282 = vmatprep.subr.bf16.mxu0 0
    %283 = vmatpush1.bf16.msra.mxu0 %v262
    %284 = vmatprep.subr.bf16.mxu0 0
    %285 = vmatpush1.bf16.msra.mxu0 %v263
    %286 = vmatprep.subr.bf16.mxu0 0
    %287 = vmatpush1.bf16.msra.mxu0 %v264
    %288 = vmatprep.subr.bf16.mxu0 0
    %289 = vmatpush1.bf16.msra.mxu0 %v265
    %290 = vmatprep.subr.bf16.mxu0 0
    %291 = vmatpush1.bf16.msra.mxu0 0
    %292 = vmatprep.subr.bf16.mxu0 0
    %293 = vmatpush1.bf16.msra.mxu0 0
    %294 = vmatprep.subr.bf16.mxu0 0
    %295 = vmatpush1.bf16.msra.mxu0 0
    %296 = vmatprep.subr.bf16.mxu0 0
    %297 = vmatpush1.bf16.msra.mxu0 0
    %298 = vmatprep.subr.bf16.mxu0 0
    %299 = vmatpush1.bf16.msra.mxu0 0
    %300 = vmatprep.subr.bf16.mxu0 0
    %301 = vmatpush1.bf16.msra.mxu0 0
    %302 = vmatprep.subr.bf16.mxu0 0
    %303 = vmatpush1.bf16.msra.mxu0 0
    %304 = vmatprep.subr.bf16.mxu0 0
    %305 = vmatpush1.bf16.msra.mxu0 0
    %306 = vmatprep.mubr.bf16.mxu0 0
    %307 = vmatmul.mubr.bf16.gmra.mrb[0].mxu0 %v209
    %v308 = vpop.f32.mrb[0].mxu0
    %v309 = vadd.f32 0.0, %v308
    %v310 = vpop.f32.mrb[0].mxu0
    %v311 = vpop.f32.mrb[0].mxu0
    %v312 = vadd.f32 0.0, %v311
    %v313 = vpop.f32.mrb[0].mxu0
    %314 = vdwg.mxu0
    %v315 = vpack.c.bf16 %v312, %v309
    %v316 = vld [vmem:[%s4] sm:$0x1]
    %v318 = vpack.i.b16 %v316, %v316
    %v320 = vlaneseq
    %v321 = vshrl.u32 %v320, 7
    %v322 = vsub.s32 0, %v321
    %v323 = vrot.slane %v318, %v322
    %v324 = vadd.bf16 %v315, %v323
    %vm325 = vcmp.ge.bf16.partialorder %v324, 0
    %v326 = vmul.bf16 %v324, 1009007652
    %v327 = vsel %vm325, %v324, %v326
    %v328 = vld [vmem:[#allocation8] sm:$0xf]
    %v329 = vld [vmem:[#allocation8 + $0x4] sm:$0xf]
    %v330 = vld [vmem:[#allocation8 + $0x8] sm:$0xf]
    %v331 = vld [vmem:[#allocation8 + $0xc] sm:$0xf]
    %v332 = vld [vmem:[#allocation8 + $0x10] sm:$0xf]
    %v333 = vld [vmem:[#allocation8 + $0x14] sm:$0xf]
    %v334 = vld [vmem:[#allocation8 + $0x18] sm:$0xf]
    %v335 = vld [vmem:[#allocation8 + $0x1c] sm:$0xf]
    %v336 = vld [vmem:[#allocation8 + $0x20] sm:$0xf]
    %v337 = vld [vmem:[#allocation8 + $0x24] sm:$0xf]
    %v338 = vld [vmem:[#allocation8 + $0x28] sm:$0xf]
    %v339 = vld [vmem:[#allocation8 + $0x2c] sm:$0xf]
    %v340 = vld [vmem:[#allocation8 + $0x30] sm:$0xf]
    %v341 = vld [vmem:[#allocation8 + $0x34] sm:$0xf]
    %v342 = vld [vmem:[#allocation8 + $0x38] sm:$0xf]
    %v343 = vld [vmem:[#allocation8 + $0x3c] sm:$0xf]
    %v344 = vld [vmem:[%s6] sm:$0x1]
    %v346 = vlaneseq
    %v347 = vshrl.u32 %v346, 7
    %v348 = vsub.s32 0, %v347
    %v349 = vrot.slane %v344, %v348
    %v367 = vunpack.c.l.b16 %v328
    %v368 = vunpack.c.l.b16 %v329
    %v369 = vunpack.c.l.b16 %v330
    %v370 = vunpack.c.l.b16 %v331
    %v371 = vunpack.c.l.b16 %v332
    %v372 = vunpack.c.l.b16 %v333
    %v373 = vunpack.c.l.b16 %v334
    %v374 = vunpack.c.l.b16 %v335
    %v375 = vunpack.c.l.b16 %v336
    %v376 = vunpack.c.l.b16 %v337
    %v377 = vunpack.c.l.b16 %v338
    %v378 = vunpack.c.l.b16 %v339
    %v379 = vunpack.c.l.b16 %v340
    %v380 = vunpack.c.l.b16 %v341
    %v381 = vunpack.c.l.b16 %v342
    %v382 = vunpack.c.l.b16 %v343
    %v383 = vpack.c.b16 %v368, %v367
    %v384 = vpack.c.b16 %v370, %v369
    %v385 = vpack.c.b16 %v372, %v371
    %v386 = vpack.c.b16 %v374, %v373
    %v387 = vpack.c.b16 %v376, %v375
    %v388 = vpack.c.b16 %v378, %v377
    %v389 = vpack.c.b16 %v380, %v379
    %v390 = vpack.c.b16 %v382, %v381
    %399 = vmatprep.subr.bf16.mxu0 0
    %400 = vmatpush1.bf16.msra.mxu0 %v383
    %401 = vmatprep.subr.bf16.mxu0 0
    %402 = vmatpush1.bf16.msra.mxu0 %v384
    %403 = vmatprep.subr.bf16.mxu0 0
    %404 = vmatpush1.bf16.msra.mxu0 %v385
    %405 = vmatprep.subr.bf16.mxu0 0
    %406 = vmatpush1.bf16.msra.mxu0 %v386
    %407 = vmatprep.subr.bf16.mxu0 0
    %408 = vmatpush1.bf16.msra.mxu0 %v387
    %409 = vmatprep.subr.bf16.mxu0 0
    %410 = vmatpush1.bf16.msra.mxu0 %v388
    %411 = vmatprep.subr.bf16.mxu0 0
    %412 = vmatpush1.bf16.msra.mxu0 %v389
    %413 = vmatprep.subr.bf16.mxu0 0
    %414 = vmatpush1.bf16.msra.mxu0 %v390
    %415 = vmatprep.subr.bf16.mxu0 0
    %416 = vmatpush1.bf16.msra.mxu0 0
    %417 = vmatprep.subr.bf16.mxu0 0
    %418 = vmatpush1.bf16.msra.mxu0 0
    %419 = vmatprep.subr.bf16.mxu0 0
    %420 = vmatpush1.bf16.msra.mxu0 0
    %421 = vmatprep.subr.bf16.mxu0 0
    %422 = vmatpush1.bf16.msra.mxu0 0
    %423 = vmatprep.subr.bf16.mxu0 0
    %424 = vmatpush1.bf16.msra.mxu0 0
    %425 = vmatprep.subr.bf16.mxu0 0
    %426 = vmatpush1.bf16.msra.mxu0 0
    %427 = vmatprep.subr.bf16.mxu0 0
    %428 = vmatpush1.bf16.msra.mxu0 0
    %429 = vmatprep.subr.bf16.mxu0 0
    %430 = vmatpush1.bf16.msra.mxu0 0
    %431 = vmatprep.mubr.bf16.mxu0 0
    %432 = vmatmul.mubr.bf16.gmra.mrb[0].mxu0 %v327
    %v433 = vpop.f32.mrb[0].mxu0
    %v434 = vadd.f32 %v349, %v433
    %v435 = vpop.f32.mrb[0].mxu0
    %v436 = vpop.f32.mrb[0].mxu0
    %v437 = vadd.f32 %v349, %v436
    %v438 = vpop.f32.mrb[0].mxu0
    %439 = vdwg.mxu0
    %v440 = vmul.f32 %v434, 0.5
    %v441 = vmul.f32 %v437, 0.5
    %v442 = vtanh.pop %v440
    %v443 = vtanh.pop %v441
    %v444 = vadd.f32 %v442, 1.0
    %v445 = vadd.f32 %v443, 1.0
    %v446 = vmul.f32 %v444, 0.5
    %v447 = vmul.f32 %v445, 0.5
    %448 = vst [vmem:[#allocation10] sm:$0xff] %v446
    %449 = vst [vmem:[#allocation10 + $0x8] sm:$0xff] %v447
    // Predicated region
    $region46: #{tpu_custom_call.1} parent=1 // pred_check
      _
    $region47: #{tpu_custom_call.1} parent=1 // pred_check_branch
      %451 = sbr.rel (0) target = $region49
    $region48: #{tpu_custom_call.1} parent=1 // pred_region
      %s453 = ssub.s32 256, 256
      %454 = vsyncadd [#allocation4], %s453
      %s455 = sshll.u32 [#allocation10], 4
      %s456 = int_to_ptr.vmem [resolvable:$true] %s455
      %461 = dma.vmem_to_hbm [thread:$0]  %s456, 256, %s7, [#allocation4], 128, 128, 8
    $region49: #{tpu_custom_call.1} parent=1 // pred_fallthru
      _
    // Predicated region
    $region50: #{tpu_custom_call.1} parent=1 // pred_check
      _
    $region51: #{tpu_custom_call.1} parent=1 // pred_check_branch
      %463 = sbr.rel (0) target = $region53
    $region52: #{tpu_custom_call.1} parent=1 // pred_region
      %464 = dma.done [#allocation4], 256
    $region53: #{tpu_custom_call.1} parent=1 // pred_fallthru
      _
    %465 = vsyncpa [#allocation3], 1
    %466 = vsyncpa [#allocation6], 1
    %467 = vsyncpa [#allocation9], 1
    %468 = vsyncpa [#allocation4], 1

</llo_original>
